<compile_context>
chip_gen: v7x
topology: tpu7x:2x2x1
jax: 0.10.0
libtpu: 0.0.40
codegen_flags: <defaults>
</compile_context>

<pallas_src>
import functools

import jax
import jax.numpy as jnp
from jax import lax
from jax.experimental import pallas as pl
from jax.experimental.pallas import tpu as pltpu

LOG_2PI = 1.8378770664093453  # log(2*pi)
_LANE = 128
_MAX_TILE_B = 2048


# ----------------------------------------------------------------------------
# MLP body.  x is (TILE_B, S) (batch on sublanes for this one input); the
# first matmul contracts the feature axis of both operands (NT matmul), so all
# hidden activations and logits come out transposed: (features, TILE_B) with
# the batch on the LANE axis for full-width tanh / exp / softmax reductions.
# ----------------------------------------------------------------------------
def _mlp_logits_t(x, w1T, b1, w2T, b2, w3T, b3):
    h = jnp.tanh(
        lax.dot_general(w1T, x, (((1,), (1,)), ((), ())),
                        preferred_element_type=jnp.float32) + b1)
    h = jnp.tanh(jnp.dot(w2T, h, preferred_element_type=jnp.float32) + b2)
    return jnp.dot(w3T, h, preferred_element_type=jnp.float32) + b3


# ----------------------------------------------------------------------------
# Discrete head: Categorical(logits).sample() via Gumbel-max, one-hot action,
# log_prob, prob, entropy  -- PPO_Actor.discrete_forward(deterministic=False)
# ----------------------------------------------------------------------------
def _discrete_kernel(x_ref, w1T_ref, b1_ref, w2T_ref, b2_ref, w3T_ref, b3_ref,
                     gT_ref, a_ref, stats_ref):
    logits = _mlp_logits_t(x_ref[...], w1T_ref[...], b1_ref[...],
                           w2T_ref[...], b2_ref[...], w3T_ref[...], b3_ref[...])
    A, T = logits.shape

    # Stable softmax stats; exp(z) computed once and reused for entropy.
    m = jnp.max(logits, axis=0, keepdims=True)
    z = logits - m
    ez = jnp.exp(z)
    s = jnp.sum(ez, axis=0, keepdims=True)
    log_s = jnp.log(s)
    inv_s = 1.0 / s  # exact reciprocal; cost negligible, avoids ratio bias

    # Gumbel-max sample, kept fully 2-D: smallest row index among maxima.
    score = logits + gT_ref[...]
    row_f = lax.broadcasted_iota(jnp.int32, (A, T), 0).astype(jnp.float32)
    is_max = score >= jnp.max(score, axis=0, keepdims=True)
    sel = jnp.min(jnp.where(is_max, row_f, float(A)), axis=0, keepdims=True)
    onehot = row_f == sel

    a_ref[...] = onehot.astype(a_ref.dtype)          # F.one_hot(a, A)^T

    z_sel = jnp.sum(jnp.where(onehot, z, 0.0), axis=0, keepdims=True)
    lp = z_sel - log_s                                # log softmax at sampled a
    p = jnp.exp(lp)                                   # probs == exp(logprob)
    ent = log_s - jnp.sum(ez * z, axis=0, keepdims=True) * inv_s

    # Assemble the (3, T) stats slab via broadcasted select (pure VPU, no
    # layout-sensitive concat) and write it with a single lane-dense store.
    row = lax.broadcasted_iota(jnp.int32, (3, T), 0)
    stats_ref[...] = jnp.where(row == 0, lp, jnp.where(row == 1, p, ent))


# ----------------------------------------------------------------------------
# Continuous head: MultivariateNormal(mu, I).rsample(), log_prob, prob.
# (logstd == 0 -> std == 1 -> identity covariance; entropy is a constant
# computed in the wrapper.)
# ----------------------------------------------------------------------------
def _continuous_kernel(x_ref, w1T_ref, b1_ref, w2T_ref, b2_ref, w3T_ref, b3_ref,
                       epsT_ref, a_ref, stats_ref):
    mu = _mlp_logits_t(x_ref[...], w1T_ref[...], b1_ref[...],
                       w2T_ref[...], b2_ref[...], w3T_ref[...], b3_ref[...])
    A, T = mu.shape
    eps = epsT_ref[...]
    a_ref[...] = (mu + eps).astype(a_ref.dtype)       # std = exp(0) = 1

    # log N(a; mu, I) = -0.5*||a-mu||^2 - (A/2)*log(2*pi)
    lp = -0.5 * jnp.sum(eps * eps, axis=0, keepdims=True) - 0.5 * A * LOG_2PI
    # NOTE: probs = exp(logprob) of an MVN density; may underflow to 0 for
    # large action_dim / ||eps|| (matches the torch module's torch.exp(logprobs)).
    row = lax.broadcasted_iota(jnp.int32, (2, T), 0)
    stats_ref[...] = jnp.where(row == 0, lp, jnp.exp(lp))


# ----------------------------------------------------------------------------
# pallas_call wrapper: 1-D grid over the (padded) batch, batch on lanes for
# all activations / outputs; x streamed batch-on-sublane.
# ----------------------------------------------------------------------------
def _tiling(batch):
    """Lane-aligned padding, tile size a multiple of 128, capped; and on large
    batches force >= 2 grid steps so v7x's second TensorCore gets work."""
    b_lane = ((max(batch, 1) + _LANE - 1) // _LANE) * _LANE
    tile_b = min(_MAX_TILE_B, b_lane)
    if b_lane >= 2 * _LANE:
        half = max((b_lane // 2 // _LANE) * _LANE, _LANE)
        tile_b = min(tile_b, half)
    b_pad = ((b_lane + tile_b - 1) // tile_b) * tile_b
    return tile_b, b_pad


def _run_head(kernel, x_pad, paramsT, noiseT, action_dtype, stats_rows, tile_b):
    w1T, b1, w2T, b2, w3T, b3 = paramsT
    Bp, S = x_pad.shape
    A = w3T.shape[0]
    grid = (Bp // tile_b,)

    def lane_spec(rows):             # batch on lanes, tiled
        return pl.BlockSpec((rows, tile_b), lambda i: (0, i))

    def sublane_spec(cols):          # batch on sublanes (state input), tiled
        return pl.BlockSpec((tile_b, cols), lambda i: (i, 0))

    def resident_spec(shape):        # constant index_map -> stays in VMEM
        return pl.BlockSpec(shape, lambda i: (0,) * len(shape))

    out_shapes = (
        jax.ShapeDtypeStruct((A, Bp), action_dtype),        # action^T
        jax.ShapeDtypeStruct((stats_rows, Bp), jnp.float32),  # per-sample stats
    )
    in_specs = ([sublane_spec(S)]
                + [resident_spec(p.shape) for p in (w1T, b1, w2T, b2, w3T, b3)]
                + [lane_spec(A)])
    return pl.pallas_call(
        kernel,
        out_shape=out_shapes,
        grid=grid,
        in_specs=in_specs,
        out_specs=(lane_spec(A), lane_spec(stats_rows)),
        compiler_params=pltpu.CompilerParams(
            dimension_semantics=("parallel",),   # v7x: shard batch on 2 TCs
            vmem_limit_bytes=32 * 1024 * 1024,   # explicit: v5e default is 16 MiB;
                                                 # tile_b=2048 uses <1 MiB/tile, well
                                                 # under v7x's 64 MiB physical VMEM
        ),
    )(x_pad, w1T, b1, w2T, b2, w3T, b3, noiseT)


@functools.partial(jax.jit, static_argnames=("is_discrete",))
def ppo_actor_forward(x, params, key, *, is_discrete):
    """Returns (action, metadata) like PPO_Actor.forward(deterministic=False)."""
    B, S = x.shape
    w1, b1, w2, b2, w3, b3 = params
    A = w3.shape[1]
    tile_b, b_pad = _tiling(B)

    # Zero-pad the batch only; no wrapper transpose (folded into the kernel's
    # first matmul).  Weights become (out, in) f32, biases (out, 1) f32.
    x_pad = jnp.zeros((b_pad, S), jnp.float32).at[:B, :].set(x.astype(jnp.float32))
    paramsT = (w1.T.astype(jnp.float32), b1.reshape(-1, 1).astype(jnp.float32),
               w2.T.astype(jnp.float32), b2.reshape(-1, 1).astype(jnp.float32),
               w3.T.astype(jnp.float32), b3.reshape(-1, 1).astype(jnp.float32))

    if is_discrete:
        noise = jax.random.gumbel(key, (A, b_pad), jnp.float32)   # exact Gumbel(0,1)
        aT, stats = _run_head(_discrete_kernel, x_pad, paramsT, noise,
                              jnp.int32, 3, tile_b)
        entropy = stats[2, :B]
    else:
        noise = jax.random.normal(key, (A, b_pad), jnp.float32)
        aT, stats = _run_head(_continuous_kernel, x_pad, paramsT, noise,
                              jnp.float32, 2, tile_b)
        # MVN entropy with identity covariance is a constant: 0.5*A*(1 + log 2*pi)
        entropy = jnp.full((B,), 0.5 * A * (1.0 + LOG_2PI), jnp.float32)

    a = aT[:, :B].T                        # (B, A): one-hot (int32) or sample
    logprobs = stats[0, :B][:, None]       # (B, 1)
    probs = stats[1, :B][:, None]          # (B, 1)
    # TODO(synk): the torch.distributions object ("dist") has no JAX/Pallas
    # equivalent; all derived statistics are returned instead.
    return a, {"dist": None, "probs": probs, "logprobs": logprobs,
               "entropy": entropy}


# ----------------------------------------------------------------------------
# Deterministic parameter construction (synthetic, 'actor'-style small init).
# Weights stored (in_features, out_features); biases (1, out_features).
# ----------------------------------------------------------------------------
def init_params(key, state_dim, hidden_dims, action_dim):
    dims = [state_dim] + list(hidden_dims) + [action_dim]
    params = []
    for i, (d_in, d_out) in enumerate(zip(dims[:-1], dims[1:])):
        key, kw = jax.random.split(key)
        scale = 0.01 if i == len(dims) - 2 else (1.0 / jnp.sqrt(d_in))
        w = scale * jax.random.normal(kw, (d_in, d_out), jnp.float32)
        b = jnp.zeros((1, d_out), jnp.float32)
        params += [w, b]
    return tuple(params)


if __name__ == "__main__":
    B, STATE_DIM, HIDDEN, ACTION_DIM = 8, 16, [32, 32], 6

    root = jax.random.PRNGKey(0)
    k_param, k_state, k_samp_d, k_samp_c = jax.random.split(root, 4)

    params = init_params(k_param, STATE_DIM, HIDDEN, ACTION_DIM)
    state = jax.random.normal(k_state, (B, STATE_DIM), jnp.float32)

    # Discrete policy head
    a_d, meta_d = ppo_actor_forward(state, params, k_samp_d, is_discrete=True)
    # Continuous policy head
    a_c, meta_c = ppo_actor_forward(state, params, k_samp_c, is_discrete=False)

    jax.block_until_ready((a_d, meta_d["logprobs"], meta_d["probs"], meta_d["entropy"],
                           a_c, meta_c["logprobs"], meta_c["probs"], meta_c["entropy"]))

    # Shape / dtype contract.
    assert a_d.shape == (B, ACTION_DIM) and a_d.dtype == jnp.int32
    assert bool(jnp.all(jnp.sum(a_d, axis=-1) == 1))
    assert a_c.shape == (B, ACTION_DIM) and a_c.dtype == jnp.float32
    assert meta_d["logprobs"].shape == (B, 1) and meta_d["entropy"].shape == (B,)
    assert meta_c["logprobs"].shape == (B, 1) and meta_c["entropy"].shape == (B,)

    # Discrete numerical sanity (f32 end-to-end: tight tolerances).
    ent_d = meta_d["entropy"]
    assert bool(jnp.all(ent_d >= -1e-4))
    assert bool(jnp.all(ent_d <= jnp.log(ACTION_DIM) + 1e-4))
    assert bool(jnp.all(meta_d["probs"] > 0.0))
    assert bool(jnp.all(meta_d["probs"] <= 1.0 + 1e-5))
    assert bool(jnp.allclose(jnp.exp(meta_d["logprobs"]), meta_d["probs"],
                             rtol=1e-3, atol=1e-6))

    # Continuous head: mu recovered from (a - eps) matches a pure-JAX reference,
    # and logprob matches the closed-form identity-covariance MVN density.
    mu_ref = state
    for i in range(0, len(params), 2):
        w, b = params[i], params[i + 1]
        mu_ref = mu_ref @ w + b
        if i < len(params) - 2:
            mu_ref = jnp.tanh(mu_ref)
    _, b_pad = _tiling(B)
    eps_used = jax.random.normal(k_samp_c, (ACTION_DIM, b_pad), jnp.float32)[:, :B].T
    assert bool(jnp.allclose(a_c - eps_used, mu_ref, rtol=1e-3, atol=2e-3))
    lp_ref = (-0.5 * jnp.sum(eps_used * eps_used, axis=-1, keepdims=True)
              - 0.5 * ACTION_DIM * LOG_2PI)
    assert bool(jnp.allclose(meta_c["logprobs"], lp_ref, rtol=1e-4, atol=1e-4))
    assert bool(jnp.allclose(meta_c["entropy"],
                             0.5 * ACTION_DIM * (1.0 + LOG_2PI), rtol=1e-6))

    print("KERNEL_OK")
</pallas_src>

<mosaic_0001>
module attributes {stable_mosaic.version = 11 : i64} {
  func.func @_discrete_kernel(%arg0: i32, %arg1: memref<128x16xf32, #tpu.memory_space<vmem>>, %arg2: memref<32x16xf32, #tpu.memory_space<vmem>>, %arg3: memref<32x1xf32, #tpu.memory_space<vmem>>, %arg4: memref<32x32xf32, #tpu.memory_space<vmem>>, %arg5: memref<32x1xf32, #tpu.memory_space<vmem>>, %arg6: memref<6x32xf32, #tpu.memory_space<vmem>>, %arg7: memref<6x1xf32, #tpu.memory_space<vmem>>, %arg8: memref<6x128xf32, #tpu.memory_space<vmem>>, %arg9: memref<6x128xi32, #tpu.memory_space<vmem>>, %arg10: memref<3x128xf32, #tpu.memory_space<vmem>>) attributes {dimension_semantics = [#tpu.dimension_semantics<parallel>], iteration_bounds = array<i64: 1>, scalar_prefetch = 0 : i64, scratch_operands = 0 : i64, tpu.core_type = #tpu.core_type<tc>, window_params = [{transform_indices = @transform_0, window_bounds = array<i64: 128, 16>}, {pipeline_mode = #tpu.pipeline_mode<synchronous>, transform_indices = @transform_1, window_bounds = array<i64: 32, 16>}, {pipeline_mode = #tpu.pipeline_mode<synchronous>, transform_indices = @transform_2, window_bounds = array<i64: 32, 1>}, {pipeline_mode = #tpu.pipeline_mode<synchronous>, transform_indices = @transform_3, window_bounds = array<i64: 32, 32>}, {pipeline_mode = #tpu.pipeline_mode<synchronous>, transform_indices = @transform_4, window_bounds = array<i64: 32, 1>}, {pipeline_mode = #tpu.pipeline_mode<synchronous>, transform_indices = @transform_5, window_bounds = array<i64: 6, 32>}, {pipeline_mode = #tpu.pipeline_mode<synchronous>, transform_indices = @transform_6, window_bounds = array<i64: 6, 1>}, {transform_indices = @transform_7, window_bounds = array<i64: 6, 128>}, {transform_indices = @transform_8, window_bounds = array<i64: 6, 128>}, {transform_indices = @transform_9, window_bounds = array<i64: 3, 128>}]} {
    %c0 = arith.constant 0 : index
    %c0_0 = arith.constant 0 : index
    %0 = vector.load %arg1[%c0, %c0_0] : memref<128x16xf32, #tpu.memory_space<vmem>>, vector<128x16xf32>
    %c0_1 = arith.constant 0 : index
    %c0_2 = arith.constant 0 : index
    %1 = vector.load %arg2[%c0_1, %c0_2] : memref<32x16xf32, #tpu.memory_space<vmem>>, vector<32x16xf32>
    %c0_3 = arith.constant 0 : index
    %c0_4 = arith.constant 0 : index
    %2 = vector.load %arg3[%c0_3, %c0_4] : memref<32x1xf32, #tpu.memory_space<vmem>>, vector<32x1xf32>
    %c0_5 = arith.constant 0 : index
    %c0_6 = arith.constant 0 : index
    %3 = vector.load %arg4[%c0_5, %c0_6] : memref<32x32xf32, #tpu.memory_space<vmem>>, vector<32x32xf32>
    %c0_7 = arith.constant 0 : index
    %c0_8 = arith.constant 0 : index
    %4 = vector.load %arg5[%c0_7, %c0_8] : memref<32x1xf32, #tpu.memory_space<vmem>>, vector<32x1xf32>
    %c0_9 = arith.constant 0 : index
    %c0_10 = arith.constant 0 : index
    %5 = vector.load %arg6[%c0_9, %c0_10] : memref<6x32xf32, #tpu.memory_space<vmem>>, vector<6x32xf32>
    %c0_11 = arith.constant 0 : index
    %c0_12 = arith.constant 0 : index
    %6 = vector.load %arg7[%c0_11, %c0_12] : memref<6x1xf32, #tpu.memory_space<vmem>>, vector<6x1xf32>
    %cst = arith.constant dense<0.000000e+00> : vector<32x128xf32>
    %7 = tpu.matmul %1, %0, %cst {dimension_numbers = #tpu.dot_dimension_numbers<[1], [1], [0], [0], [0, 0, 1, 0], [], []>} : vector<32x16xf32>, vector<128x16xf32>, vector<32x128xf32> -> vector<32x128xf32>
    %8 = vector.broadcast %2 : vector<32x1xf32> to vector<32x128xf32>
    %9 = arith.addf %7, %8 : vector<32x128xf32>
    %10 = math.tanh %9 : vector<32x128xf32>
    %cst_13 = arith.constant dense<0.000000e+00> : vector<32x128xf32>
    %11 = tpu.matmul %3, %10, %cst_13 {dimension_numbers = #tpu.dot_dimension_numbers<[1], [0], [0], [1], [0, 0, 1, 1], [], []>} : vector<32x32xf32>, vector<32x128xf32>, vector<32x128xf32> -> vector<32x128xf32>
    %12 = vector.broadcast %4 : vector<32x1xf32> to vector<32x128xf32>
    %13 = arith.addf %11, %12 : vector<32x128xf32>
    %14 = math.tanh %13 : vector<32x128xf32>
    %cst_14 = arith.constant dense<0.000000e+00> : vector<6x128xf32>
    %15 = tpu.matmul %5, %14, %cst_14 {dimension_numbers = #tpu.dot_dimension_numbers<[1], [0], [0], [1], [0, 0, 1, 1], [], []>} : vector<6x32xf32>, vector<32x128xf32>, vector<6x128xf32> -> vector<6x128xf32>
    %16 = vector.broadcast %6 : vector<6x1xf32> to vector<6x128xf32>
    %17 = arith.addf %15, %16 : vector<6x128xf32>
    %cst_15 = arith.constant dense<0xFF800000> : vector<128xf32>
    %18 = vector.multi_reduction <maximumf>, %17, %cst_15 [0] : vector<6x128xf32> to vector<128xf32>
    %19 = vector.shape_cast %18 : vector<128xf32> to vector<1x128xf32>
    %20 = vector.broadcast %19 : vector<1x128xf32> to vector<6x128xf32>
    %21 = arith.subf %17, %20 : vector<6x128xf32>
    %22 = math.exp %21 : vector<6x128xf32>
    %cst_16 = arith.constant dense<0.000000e+00> : vector<128xf32>
    %23 = vector.multi_reduction <add>, %22, %cst_16 [0] : vector<6x128xf32> to vector<128xf32>
    %24 = vector.shape_cast %23 : vector<128xf32> to vector<1x128xf32>
    %25 = math.log %24 : vector<1x128xf32>
    %cst_17 = arith.constant 1.000000e+00 : f32
    %26 = vector.broadcast %cst_17 : f32 to vector<1x128xf32>
    %27 = arith.divf %26, %24 : vector<1x128xf32>
    %c0_18 = arith.constant 0 : index
    %c0_19 = arith.constant 0 : index
    %28 = vector.load %arg8[%c0_18, %c0_19] : memref<6x128xf32, #tpu.memory_space<vmem>>, vector<6x128xf32>
    %29 = arith.addf %17, %28 : vector<6x128xf32>
    %30 = tpu.iota {dimensions = array<i32: 0>} : vector<6x128xi32>
    %31 = arith.sitofp %30 : vector<6x128xi32> to vector<6x128xf32>
    %cst_20 = arith.constant dense<0xFF800000> : vector<128xf32>
    %32 = vector.multi_reduction <maximumf>, %29, %cst_20 [0] : vector<6x128xf32> to vector<128xf32>
    %33 = vector.shape_cast %32 : vector<128xf32> to vector<1x128xf32>
    %34 = vector.broadcast %33 : vector<1x128xf32> to vector<6x128xf32>
    %35 = arith.cmpf oge, %29, %34 : vector<6x128xf32>
    %cst_21 = arith.constant 6.000000e+00 : f32
    %36 = vector.broadcast %cst_21 : f32 to vector<6x128xf32>
    %37 = arith.select %35, %31, %36 : vector<6x128xi1>, vector<6x128xf32>
    %cst_22 = arith.constant dense<0x7F800000> : vector<128xf32>
    %38 = vector.multi_reduction <minimumf>, %37, %cst_22 [0] : vector<6x128xf32> to vector<128xf32>
    %39 = vector.shape_cast %38 : vector<128xf32> to vector<1x128xf32>
    %40 = vector.broadcast %39 : vector<1x128xf32> to vector<6x128xf32>
    %41 = arith.cmpf oeq, %31, %40 : vector<6x128xf32>
    %42 = arith.extui %41 : vector<6x128xi1> to vector<6x128xi32>
    %c0_23 = arith.constant 0 : index
    %c0_24 = arith.constant 0 : index
    %43 = vector.load %arg9[%c0_23, %c0_24] : memref<6x128xi32, #tpu.memory_space<vmem>>, vector<6x128xi32>
    tpu.vector_store %arg9[%c0_23, %c0_24], %42 {strides = array<i32>} : memref<6x128xi32, #tpu.memory_space<vmem>>, vector<6x128xi32>,
    %cst_25 = arith.constant 0.000000e+00 : f32
    %44 = vector.broadcast %cst_25 : f32 to vector<6x128xf32>
    %45 = arith.select %41, %21, %44 : vector<6x128xi1>, vector<6x128xf32>
    %cst_26 = arith.constant dense<0.000000e+00> : vector<128xf32>
    %46 = vector.multi_reduction <add>, %45, %cst_26 [0] : vector<6x128xf32> to vector<128xf32>
    %47 = vector.shape_cast %46 : vector<128xf32> to vector<1x128xf32>
    %48 = arith.subf %47, %25 : vector<1x128xf32>
    %49 = math.exp %48 : vector<1x128xf32>
    %50 = arith.mulf %22, %21 : vector<6x128xf32>
    %cst_27 = arith.constant dense<0.000000e+00> : vector<128xf32>
    %51 = vector.multi_reduction <add>, %50, %cst_27 [0] : vector<6x128xf32> to vector<128xf32>
    %52 = vector.shape_cast %51 : vector<128xf32> to vector<1x128xf32>
    %53 = arith.mulf %52, %27 : vector<1x128xf32>
    %54 = arith.subf %25, %53 : vector<1x128xf32>
    %55 = tpu.iota {dimensions = array<i32: 0>} : vector<3x128xi32>
    %c0_i32 = arith.constant 0 : i32
    %56 = vector.broadcast %c0_i32 : i32 to vector<3x128xi32>
    %57 = arith.cmpi eq, %55, %56 : vector<3x128xi32>
    %c1_i32 = arith.constant 1 : i32
    %58 = vector.broadcast %c1_i32 : i32 to vector<3x128xi32>
    %59 = arith.cmpi eq, %55, %58 : vector<3x128xi32>
    %60 = vector.shape_cast %49 : vector<1x128xf32> to vector<1x128xf32>
    %61 = vector.broadcast %60 : vector<1x128xf32> to vector<3x128xf32>
    %62 = vector.shape_cast %54 : vector<1x128xf32> to vector<1x128xf32>
    %63 = vector.broadcast %62 : vector<1x128xf32> to vector<3x128xf32>
    %64 = arith.select %59, %61, %63 : vector<3x128xi1>, vector<3x128xf32>
    %65 = vector.shape_cast %48 : vector<1x128xf32> to vector<1x128xf32>
    %66 = vector.broadcast %65 : vector<1x128xf32> to vector<3x128xf32>
    %67 = arith.select %57, %66, %64 : vector<3x128xi1>, vector<3x128xf32>
    %c0_28 = arith.constant 0 : index
    %c0_29 = arith.constant 0 : index
    %68 = vector.load %arg10[%c0_28, %c0_29] : memref<3x128xf32, #tpu.memory_space<vmem>>, vector<3x128xf32>
    tpu.vector_store %arg10[%c0_28, %c0_29], %67 {strides = array<i32>} : memref<3x128xf32, #tpu.memory_space<vmem>>, vector<3x128xf32>,
    return
  }
  func.func @transform_0(%arg0: i32) -> (i32, i32) {
    %c0_i32 = arith.constant 0 : i32
    %c0_i32_0 = arith.constant 0 : i32
    return %arg0, %c0_i32 : i32, i32
  }
  func.func @transform_1(%arg0: i32) -> (i32, i32) {
    %c0_i32 = arith.constant 0 : i32
    %c0_i32_0 = arith.constant 0 : i32
    %c0_i32_1 = arith.constant 0 : i32
    return %c0_i32, %c0_i32_0 : i32, i32
  }
  func.func @transform_2(%arg0: i32) -> (i32, i32) {
    %c0_i32 = arith.constant 0 : i32
    %c0_i32_0 = arith.constant 0 : i32
    %c0_i32_1 = arith.constant 0 : i32
    return %c0_i32, %c0_i32_0 : i32, i32
  }
  func.func @transform_3(%arg0: i32) -> (i32, i32) {
    %c0_i32 = arith.constant 0 : i32
    %c0_i32_0 = arith.constant 0 : i32
    %c0_i32_1 = arith.constant 0 : i32
    return %c0_i32, %c0_i32_0 : i32, i32
  }
  func.func @transform_4(%arg0: i32) -> (i32, i32) {
    %c0_i32 = arith.constant 0 : i32
    %c0_i32_0 = arith.constant 0 : i32
    %c0_i32_1 = arith.constant 0 : i32
    return %c0_i32, %c0_i32_0 : i32, i32
  }
  func.func @transform_5(%arg0: i32) -> (i32, i32) {
    %c0_i32 = arith.constant 0 : i32
    %c0_i32_0 = arith.constant 0 : i32
    %c0_i32_1 = arith.constant 0 : i32
    return %c0_i32, %c0_i32_0 : i32, i32
  }
  func.func @transform_6(%arg0: i32) -> (i32, i32) {
    %c0_i32 = arith.constant 0 : i32
    %c0_i32_0 = arith.constant 0 : i32
    %c0_i32_1 = arith.constant 0 : i32
    return %c0_i32, %c0_i32_0 : i32, i32
  }
  func.func @transform_7(%arg0: i32) -> (i32, i32) {
    %c0_i32 = arith.constant 0 : i32
    %c0_i32_0 = arith.constant 0 : i32
    return %c0_i32, %arg0 : i32, i32
  }
  func.func @transform_8(%arg0: i32) -> (i32, i32) {
    %c0_i32 = arith.constant 0 : i32
    %c0_i32_0 = arith.constant 0 : i32
    return %c0_i32, %arg0 : i32, i32
  }
  func.func @transform_9(%arg0: i32) -> (i32, i32) {
    %c0_i32 = arith.constant 0 : i32
    %c0_i32_0 = arith.constant 0 : i32
    return %c0_i32, %arg0 : i32, i32
  }
}

</mosaic_0001>

<llo_original>
// kernel: ppo_actor_forward.1
$region0: #{ppo_actor_forward.1}
  #allocation0 [shape = 'u32[]', space=smem, size = 0x4, offset = 0x4, fixed_abs, tag = 'smem constant byte address 0x4 - core index']
  #allocation1 [shape = 'u32[144,128]{1,0:T(1,128)}', space=vmem, size = 0x12000, scoped, tag = 'internal scratch']
  %s0 = inlined_call_operand.vmem [shape: f32[128,16], index: 0, kind: input, shape index: {}]
  %s1 = inlined_call_operand.vmem [shape: f32[32,16], index: 1, kind: input, shape index: {}]
  %s2 = inlined_call_operand.vmem [shape: f32[32,1], index: 2, kind: input, shape index: {}]
  %s3 = inlined_call_operand.vmem [shape: f32[32,32], index: 3, kind: input, shape index: {}]
  %s4 = inlined_call_operand.vmem [shape: f32[32,1], index: 4, kind: input, shape index: {}]
  %s5 = inlined_call_operand.vmem [shape: f32[6,32], index: 5, kind: input, shape index: {}]
  %s6 = inlined_call_operand.vmem [shape: f32[6,1], index: 6, kind: input, shape index: {}]
  %s7 = inlined_call_operand.vmem [shape: f32[6,128], index: 7, kind: input, shape index: {}]
  %s8 = inlined_call_operand.vmem [shape: s32[6,128], index: 8, kind: output, shape index: {0}]
  %s9 = inlined_call_operand.vmem [shape: f32[3,128], index: 9, kind: output, shape index: {1}]
  %10 = xla_tuple %s8, %s9
  %s11 = sld [smem:[#allocation0]]
  $region50: #{ppo_actor_forward.1} parent=0
    _
  %s13 = ssub.s32 1, %s11
  %s14 = scalar_select 0, %s13, %s11
  // Predicated region
  $region2: #{ppo_actor_forward.1} parent=0 // pred_check
    _
  $region3: #{ppo_actor_forward.1} parent=0 // pred_check_branch
    %16 = sbr.rel (0) target = $region5
  $region4: #{ppo_actor_forward.1} parent=0 // pred_region
    _
  $region5: #{ppo_actor_forward.1} parent=0 // pred_fallthru
    _
  // Predicated region
  $region6: #{ppo_actor_forward.1} parent=0 // pred_check
    _
  $region7: #{ppo_actor_forward.1} parent=0 // pred_check_branch
    %18 = sbr.rel (0) target = $region9
  $region8: #{ppo_actor_forward.1} parent=0 // pred_region
    _
  $region9: #{ppo_actor_forward.1} parent=0 // pred_fallthru
    _
  // Predicated region
  $region10: #{ppo_actor_forward.1} parent=0 // pred_check
    _
  $region11: #{ppo_actor_forward.1} parent=0 // pred_check_branch
    %20 = sbr.rel (0) target = $region13
  $region12: #{ppo_actor_forward.1} parent=0 // pred_region
    _
  $region13: #{ppo_actor_forward.1} parent=0 // pred_fallthru
    _
  // Predicated region
  $region14: #{ppo_actor_forward.1} parent=0 // pred_check
    _
  $region15: #{ppo_actor_forward.1} parent=0 // pred_check_branch
    %22 = sbr.rel (0) target = $region17
  $region16: #{ppo_actor_forward.1} parent=0 // pred_region
    _
  $region17: #{ppo_actor_forward.1} parent=0 // pred_fallthru
    _
  // Predicated region
  $region18: #{ppo_actor_forward.1} parent=0 // pred_check
    _
  $region19: #{ppo_actor_forward.1} parent=0 // pred_check_branch
    %24 = sbr.rel (0) target = $region21
  $region20: #{ppo_actor_forward.1} parent=0 // pred_region
    _
  $region21: #{ppo_actor_forward.1} parent=0 // pred_fallthru
    _
  // Predicated region
  $region22: #{ppo_actor_forward.1} parent=0 // pred_check
    _
  $region23: #{ppo_actor_forward.1} parent=0 // pred_check_branch
    %26 = sbr.rel (0) target = $region25
  $region24: #{ppo_actor_forward.1} parent=0 // pred_region
    _
  $region25: #{ppo_actor_forward.1} parent=0 // pred_fallthru
    _
  // Predicated region
  $region26: #{ppo_actor_forward.1} parent=0 // pred_check
    _
  $region27: #{ppo_actor_forward.1} parent=0 // pred_check_branch
    %28 = sbr.rel (0) target = $region29
  $region28: #{ppo_actor_forward.1} parent=0 // pred_region
    _
  $region29: #{ppo_actor_forward.1} parent=0 // pred_fallthru
    _
  // Predicated region
  $region30: #{ppo_actor_forward.1} parent=0 // pred_check
    _
  $region31: #{ppo_actor_forward.1} parent=0 // pred_check_branch
    %30 = sbr.rel (0) target = $region33
  $region32: #{ppo_actor_forward.1} parent=0 // pred_region
    _
  $region33: #{ppo_actor_forward.1} parent=0 // pred_fallthru
    _
  %v31 = vld [vmem:[%s0] sm:$0xff]
  %v32 = vld [vmem:[%s0 + $0x8] sm:$0xff]
  %v33 = vld [vmem:[%s0 + $0x10] sm:$0xff]
  %v34 = vld [vmem:[%s0 + $0x18] sm:$0xff]
  %v35 = vld [vmem:[%s0 + $0x20] sm:$0xff]
  %v36 = vld [vmem:[%s0 + $0x28] sm:$0xff]
  %v37 = vld [vmem:[%s0 + $0x30] sm:$0xff]
  %v38 = vld [vmem:[%s0 + $0x38] sm:$0xff]
  %v39 = vld [vmem:[%s0 + $0x40] sm:$0xff]
  %v40 = vld [vmem:[%s0 + $0x48] sm:$0xff]
  %v41 = vld [vmem:[%s0 + $0x50] sm:$0xff]
  %v42 = vld [vmem:[%s0 + $0x58] sm:$0xff]
  %v43 = vld [vmem:[%s0 + $0x60] sm:$0xff]
  %v44 = vld [vmem:[%s0 + $0x68] sm:$0xff]
  %v45 = vld [vmem:[%s0 + $0x70] sm:$0xff]
  %v46 = vld [vmem:[%s0 + $0x78] sm:$0xff]
  %v47 = vld [vmem:[%s1] sm:$0xff]
  %v48 = vld [vmem:[%s1 + $0x8] sm:$0xff]
  %v49 = vld [vmem:[%s1 + $0x10] sm:$0xff]
  %v50 = vld [vmem:[%s1 + $0x18] sm:$0xff]
  %v51 = vld [vmem:[%s2] sm:$0xff]
  %v52 = vld [vmem:[%s2 + $0x8] sm:$0xff]
  %v53 = vld [vmem:[%s2 + $0x10] sm:$0xff]
  %v54 = vld [vmem:[%s2 + $0x18] sm:$0xff]
  %v55 = vld [vmem:[%s3] sm:$0xff]
  %v56 = vld [vmem:[%s3 + $0x8] sm:$0xff]
  %v57 = vld [vmem:[%s3 + $0x10] sm:$0xff]
  %v58 = vld [vmem:[%s3 + $0x18] sm:$0xff]
  %v59 = vld [vmem:[%s4] sm:$0xff]
  %v60 = vld [vmem:[%s4 + $0x8] sm:$0xff]
  %v61 = vld [vmem:[%s4 + $0x10] sm:$0xff]
  %v62 = vld [vmem:[%s4 + $0x18] sm:$0xff]
  %v63 = vld [vmem:[%s5] sm:$0x3f]
  %v64 = vld [vmem:[%s6] sm:$0x3f]
  %66 = vset.pattern.permute.xlu0 0
  %67 = vperm.xlu0 %66, %v51
  %v68 = vpop.permute.xlu0 %67
  %71 = vset.pattern.permute.xlu0 0
  %72 = vperm.xlu0 %71, %v52
  %v73 = vpop.permute.xlu0 %72
  %76 = vset.pattern.permute.xlu0 0
  %77 = vperm.xlu0 %76, %v53
  %v78 = vpop.permute.xlu0 %77
  %81 = vset.pattern.permute.xlu0 0
  %82 = vperm.xlu0 %81, %v54
  %v83 = vpop.permute.xlu0 %82
  %vm85 = vcmask 130048
  %v87 = vsel %vm85, %v47, 0
  %v90 = vsel %vm85, %v48, 0
  %v93 = vsel %vm85, %v49, 0
  %v96 = vsel %vm85, %v50, 0
  %v99 = vsel %vm85, %v31, 0
  %v102 = vsel %vm85, %v32, 0
  %v105 = vsel %vm85, %v33, 0
  %v108 = vsel %vm85, %v34, 0
  %v111 = vsel %vm85, %v35, 0
  %v114 = vsel %vm85, %v36, 0
  %v117 = vsel %vm85, %v37, 0
  %v120 = vsel %vm85, %v38, 0
  %v123 = vsel %vm85, %v39, 0
  %v126 = vsel %vm85, %v40, 0
  %v129 = vsel %vm85, %v41, 0
  %v132 = vsel %vm85, %v42, 0
  %v135 = vsel %vm85, %v43, 0
  %v138 = vsel %vm85, %v44, 0
  %v141 = vsel %vm85, %v45, 0
  %v144 = vsel %vm85, %v46, 0
  %146 = vmatprep.subr.mxu0 0.0
  %147 = vmatpush1.xpose.msra.mxu0 %v99
  %148 = vmatprep.subr.mxu0 0.0
  %149 = vmatpush1.xpose.msra.mxu0 %v102
  %150 = vmatprep.subr.mxu0 0.0
  %151 = vmatpush1.xpose.msra.mxu0 %v105
  %152 = vmatprep.subr.mxu0 0.0
  %153 = vmatpush1.xpose.msra.mxu0 %v108
  %154 = vmatprep.subr.mxu0 0.0
  %155 = vmatpush1.xpose.msra.mxu0 %v111
  %156 = vmatprep.subr.mxu0 0.0
  %157 = vmatpush1.xpose.msra.mxu0 %v114
  %158 = vmatprep.subr.mxu0 0.0
  %159 = vmatpush1.xpose.msra.mxu0 %v117
  %160 = vmatprep.subr.mxu0 0.0
  %161 = vmatpush1.xpose.msra.mxu0 %v120
  %162 = vmatprep.subr.mxu0 0.0
  %163 = vmatpush1.xpose.msra.mxu0 %v123
  %164 = vmatprep.subr.mxu0 0.0
  %165 = vmatpush1.xpose.msra.mxu0 %v126
  %166 = vmatprep.subr.mxu0 0.0
  %167 = vmatpush1.xpose.msra.mxu0 %v129
  %168 = vmatprep.subr.mxu0 0.0
  %169 = vmatpush1.xpose.msra.mxu0 %v132
  %170 = vmatprep.subr.mxu0 0.0
  %171 = vmatpush1.xpose.msra.mxu0 %v135
  %172 = vmatprep.subr.mxu0 0.0
  %173 = vmatpush1.xpose.msra.mxu0 %v138
  %174 = vmatprep.subr.mxu0 0.0
  %175 = vmatpush1.xpose.msra.mxu0 %v141
  %176 = vmatprep.subr.mxu0 0.0
  %177 = vmatpush1.xpose.msra.mxu0 %v144
  %178 = vmatprep.subr.mxu0 0.0
  %179 = vmatpush1.xpose.msra.mxu0 0.0
  %180 = vmatprep.subr.mxu0 0.0
  %181 = vmatpush1.xpose.msra.mxu0 0.0
  %182 = vmatprep.subr.mxu0 0.0
  %183 = vmatpush1.xpose.msra.mxu0 0.0
  %184 = vmatprep.subr.mxu0 0.0
  %185 = vmatpush1.xpose.msra.mxu0 0.0
  %186 = vmatprep.subr.mxu0 0.0
  %187 = vmatpush1.xpose.msra.mxu0 0.0
  %188 = vmatprep.subr.mxu0 0.0
  %189 = vmatpush1.xpose.msra.mxu0 0.0
  %190 = vmatprep.subr.mxu0 0.0
  %191 = vmatpush1.xpose.msra.mxu0 0.0
  %192 = vmatprep.subr.mxu0 0.0
  %193 = vmatpush1.xpose.msra.mxu0 0.0
  %194 = vmatprep.subr.mxu0 0.0
  %195 = vmatpush1.xpose.msra.mxu0 0.0
  %196 = vmatprep.subr.mxu0 0.0
  %197 = vmatpush1.xpose.msra.mxu0 0.0
  %198 = vmatprep.subr.mxu0 0.0
  %199 = vmatpush1.xpose.msra.mxu0 0.0
  %200 = vmatprep.subr.mxu0 0.0
  %201 = vmatpush1.xpose.msra.mxu0 0.0
  %202 = vmatprep.subr.mxu0 0.0
  %203 = vmatpush1.xpose.msra.mxu0 0.0
  %204 = vmatprep.subr.mxu0 0.0
  %205 = vmatpush1.xpose.msra.mxu0 0.0
  %206 = vmatprep.subr.mxu0 0.0
  %207 = vmatpush1.xpose.msra.mxu0 0.0
  %208 = vmatprep.subr.mxu0 0.0
  %209 = vmatpush1.xpose.msra.mxu0 0.0
  %210 = vmatprep.mubr.f32.mxu0 0.0
  %211 = vmatmul.mubr.f32.gmra.mrb[0].mxu0 %v87
  %v212 = vpop.f32.mrb[0].mxu0
  %v213 = vadd.f32 %v68, %v212
  %v214 = vpop.f32.mrb[0].mxu0
  %215 = vmatprep.mubr.f32.mxu0 0.0
  %216 = vmatmul.mubr.f32.gmra.mrb[0].mxu0 %v90
  %v217 = vpop.f32.mrb[0].mxu0
  %v218 = vadd.f32 %v73, %v217
  %v219 = vpop.f32.mrb[0].mxu0
  %220 = vmatprep.mubr.f32.mxu0 0.0
  %221 = vmatmul.mubr.f32.gmra.mrb[0].mxu0 %v93
  %v222 = vpop.f32.mrb[0].mxu0
  %v223 = vadd.f32 %v78, %v222
  %v224 = vpop.f32.mrb[0].mxu0
  %225 = vmatprep.mubr.f32.mxu0 0.0
  %226 = vmatmul.mubr.f32.gmra.mrb[0].mxu0 %v96
  %v227 = vpop.f32.mrb[0].mxu0
  %v228 = vadd.f32 %v83, %v227
  %v229 = vpop.f32.mrb[0].mxu0
  %230 = vdwg.mxu0
  %v231 = vtanh.pop %v213
  %v232 = vtanh.pop %v218
  %v233 = vtanh.pop %v223
  %v234 = vtanh.pop %v228
  %236 = vset.pattern.permute.xlu0 0
  %237 = vperm.xlu0 %236, %v59
  %v238 = vpop.permute.xlu0 %237
  %241 = vset.pattern.permute.xlu0 0
  %242 = vperm.xlu0 %241, %v60
  %v243 = vpop.permute.xlu0 %242
  %246 = vset.pattern.permute.xlu0 0
  %247 = vperm.xlu0 %246, %v61
  %v248 = vpop.permute.xlu0 %247
  %251 = vset.pattern.permute.xlu0 0
  %252 = vperm.xlu0 %251, %v62
  %v253 = vpop.permute.xlu0 %252
  %vm255 = vcmask 261120
  %v257 = vsel %vm255, %v55, 0
  %v260 = vsel %vm255, %v56, 0
  %v263 = vsel %vm255, %v57, 0
  %v266 = vsel %vm255, %v58, 0
  %268 = vmatprep.subr.mxu0 0.0
  %269 = vmatpush1.msra.mxu0 %v231
  %270 = vmatprep.subr.mxu0 0.0
  %271 = vmatpush1.msra.mxu0 %v232
  %272 = vmatprep.subr.mxu0 0.0
  %273 = vmatpush1.msra.mxu0 %v233
  %274 = vmatprep.subr.mxu0 0.0
  %275 = vmatpush1.msra.mxu0 %v234
  %276 = vmatprep.subr.mxu0 0.0
  %277 = vmatpush1.msra.mxu0 0.0
  %278 = vmatprep.subr.mxu0 0.0
  %279 = vmatpush1.msra.mxu0 0.0
  %280 = vmatprep.subr.mxu0 0.0
  %281 = vmatpush1.msra.mxu0 0.0
  %282 = vmatprep.subr.mxu0 0.0
  %283 = vmatpush1.msra.mxu0 0.0
  %284 = vmatprep.subr.mxu0 0.0
  %285 = vmatpush1.msra.mxu0 0.0
  %286 = vmatprep.subr.mxu0 0.0
  %287 = vmatpush1.msra.mxu0 0.0
  %288 = vmatprep.subr.mxu0 0.0
  %289 = vmatpush1.msra.mxu0 0.0
  %290 = vmatprep.subr.mxu0 0.0
  %291 = vmatpush1.msra.mxu0 0.0
  %292 = vmatprep.subr.mxu0 0.0
  %293 = vmatpush1.msra.mxu0 0.0
  %294 = vmatprep.subr.mxu0 0.0
  %295 = vmatpush1.msra.mxu0 0.0
  %296 = vmatprep.subr.mxu0 0.0
  %297 = vmatpush1.msra.mxu0 0.0
  %298 = vmatprep.subr.mxu0 0.0
  %299 = vmatpush1.msra.mxu0 0.0
  %300 = vmatprep.subr.mxu0 0.0
  %301 = vmatpush1.msra.mxu0 0.0
  %302 = vmatprep.subr.mxu0 0.0
  %303 = vmatpush1.msra.mxu0 0.0
  %304 = vmatprep.subr.mxu0 0.0
  %305 = vmatpush1.msra.mxu0 0.0
  %306 = vmatprep.subr.mxu0 0.0
  %307 = vmatpush1.msra.mxu0 0.0
  %308 = vmatprep.subr.mxu0 0.0
  %309 = vmatpush1.msra.mxu0 0.0
  %310 = vmatprep.subr.mxu0 0.0
  %311 = vmatpush1.msra.mxu0 0.0
  %312 = vmatprep.subr.mxu0 0.0
  %313 = vmatpush1.msra.mxu0 0.0
  %314 = vmatprep.subr.mxu0 0.0
  %315 = vmatpush1.msra.mxu0 0.0
  %316 = vmatprep.subr.mxu0 0.0
  %317 = vmatpush1.msra.mxu0 0.0
  %318 = vmatprep.subr.mxu0 0.0
  %319 = vmatpush1.msra.mxu0 0.0
  %320 = vmatprep.subr.mxu0 0.0
  %321 = vmatpush1.msra.mxu0 0.0
  %322 = vmatprep.subr.mxu0 0.0
  %323 = vmatpush1.msra.mxu0 0.0
  %324 = vmatprep.subr.mxu0 0.0
  %325 = vmatpush1.msra.mxu0 0.0
  %326 = vmatprep.subr.mxu0 0.0
  %327 = vmatpush1.msra.mxu0 0.0
  %328 = vmatprep.subr.mxu0 0.0
  %329 = vmatpush1.msra.mxu0 0.0
  %330 = vmatprep.subr.mxu0 0.0
  %331 = vmatpush1.msra.mxu0 0.0
  %332 = vmatprep.mubr.f32.mxu0 0.0
  %333 = vmatmul.mubr.f32.gmra.mrb[0].mxu0 %v257
  %v334 = vpop.f32.mrb[0].mxu0
  %v335 = vadd.f32 %v238, %v334
  %v336 = vpop.f32.mrb[0].mxu0
  %337 = vmatprep.mubr.f32.mxu0 0.0
  %338 = vmatmul.mubr.f32.gmra.mrb[0].mxu0 %v260
  %v339 = vpop.f32.mrb[0].mxu0
  %v340 = vadd.f32 %v243, %v339
  %v341 = vpop.f32.mrb[0].mxu0
  %342 = vmatprep.mubr.f32.mxu0 0.0
  %343 = vmatmul.mubr.f32.gmra.mrb[0].mxu0 %v263
  %v344 = vpop.f32.mrb[0].mxu0
  %v345 = vadd.f32 %v248, %v344
  %v346 = vpop.f32.mrb[0].mxu0
  %347 = vmatprep.mubr.f32.mxu0 0.0
  %348 = vmatmul.mubr.f32.gmra.mrb[0].mxu0 %v266
  %v349 = vpop.f32.mrb[0].mxu0
  %v350 = vadd.f32 %v253, %v349
  %v351 = vpop.f32.mrb[0].mxu0
  %352 = vdwg.mxu0
  %v353 = vtanh.pop %v335
  %v354 = vtanh.pop %v340
  %v355 = vtanh.pop %v345
  %v356 = vtanh.pop %v350
  %358 = vset.pattern.permute.xlu0 0
  %359 = vperm.xlu0 %358, %v64
  %v360 = vpop.permute.xlu0 %359
  %v363 = vsel %vm255, %v63, 0
  %365 = vmatprep.subr.mxu0 0.0
  %366 = vmatpush1.msra.mxu0 %v353
  %367 = vmatprep.subr.mxu0 0.0
  %368 = vmatpush1.msra.mxu0 %v354
  %369 = vmatprep.subr.mxu0 0.0
  %370 = vmatpush1.msra.mxu0 %v355
  %371 = vmatprep.subr.mxu0 0.0
  %372 = vmatpush1.msra.mxu0 %v356
  %373 = vmatprep.subr.mxu0 0.0
  %374 = vmatpush1.msra.mxu0 0.0
  %375 = vmatprep.subr.mxu0 0.0
  %376 = vmatpush1.msra.mxu0 0.0
  %377 = vmatprep.subr.mxu0 0.0
  %378 = vmatpush1.msra.mxu0 0.0
  %379 = vmatprep.subr.mxu0 0.0
  %380 = vmatpush1.msra.mxu0 0.0
  %381 = vmatprep.subr.mxu0 0.0
  %382 = vmatpush1.msra.mxu0 0.0
  %383 = vmatprep.subr.mxu0 0.0
  %384 = vmatpush1.msra.mxu0 0.0
  %385 = vmatprep.subr.mxu0 0.0
  %386 = vmatpush1.msra.mxu0 0.0
  %387 = vmatprep.subr.mxu0 0.0
  %388 = vmatpush1.msra.mxu0 0.0
  %389 = vmatprep.subr.mxu0 0.0
  %390 = vmatpush1.msra.mxu0 0.0
  %391 = vmatprep.subr.mxu0 0.0
  %392 = vmatpush1.msra.mxu0 0.0
  %393 = vmatprep.subr.mxu0 0.0
  %394 = vmatpush1.msra.mxu0 0.0
  %395 = vmatprep.subr.mxu0 0.0
  %396 = vmatpush1.msra.mxu0 0.0
  %397 = vmatprep.subr.mxu0 0.0
  %398 = vmatpush1.msra.mxu0 0.0
  %399 = vmatprep.subr.mxu0 0.0
  %400 = vmatpush1.msra.mxu0 0.0
  %401 = vmatprep.subr.mxu0 0.0
  %402 = vmatpush1.msra.mxu0 0.0
  %403 = vmatprep.subr.mxu0 0.0
  %404 = vmatpush1.msra.mxu0 0.0
  %405 = vmatprep.subr.mxu0 0.0
  %406 = vmatpush1.msra.mxu0 0.0
  %407 = vmatprep.subr.mxu0 0.0
  %408 = vmatpush1.msra.mxu0 0.0
  %409 = vmatprep.subr.mxu0 0.0
  %410 = vmatpush1.msra.mxu0 0.0
  %411 = vmatprep.subr.mxu0 0.0
  %412 = vmatpush1.msra.mxu0 0.0
  %413 = vmatprep.subr.mxu0 0.0
  %414 = vmatpush1.msra.mxu0 0.0
  %415 = vmatprep.subr.mxu0 0.0
  %416 = vmatpush1.msra.mxu0 0.0
  %417 = vmatprep.subr.mxu0 0.0
  %418 = vmatpush1.msra.mxu0 0.0
  %419 = vmatprep.subr.mxu0 0.0
  %420 = vmatpush1.msra.mxu0 0.0
  %421 = vmatprep.subr.mxu0 0.0
  %422 = vmatpush1.msra.mxu0 0.0
  %423 = vmatprep.subr.mxu0 0.0
  %424 = vmatpush1.msra.mxu0 0.0
  %425 = vmatprep.subr.mxu0 0.0
  %426 = vmatpush1.msra.mxu0 0.0
  %427 = vmatprep.subr.mxu0 0.0
  %428 = vmatpush1.msra.mxu0 0.0
  %429 = vmatprep.mubr.f32.mxu0 0.0
  %430 = vmatmul.mubr.f32.gmra.mrb[0].mxu0 %v363
  %v431 = vpop.f32.mrb[0].mxu0
  %v432 = vadd.f32 %v360, %v431
  %v433 = vpop.f32.mrb[0].mxu0
  %434 = vdwg.mxu0
  %vm435 = vcmask 1045504
  %v436 = vsel %vm435, %v432, -inf
  %v437 = vrot.slane %v436, 4
  %v438 = vmax.f32 %v436, %v437
  %v439 = vrot.slane %v438, 2
  %v440 = vmax.f32 %v438, %v439
  %v441 = vrot.slane %v440, 1
  %v442 = vmax.f32 %v440, %v441
  %v443 = vsub.f32 %v432, %v442
  %v444 = vmul.f32 %v443, 1.442695
  %v445 = vpow.pop %v444
  %v446 = vsel %vm435, %v445, 0.0
  %v447 = vrot.slane %v446, 4
  %v448 = vadd.f32 %v446, %v447
  %v449 = vrot.slane %v448, 2
  %v450 = vadd.f32 %v448, %v449
  %v451 = vrot.slane %v450, 1
  %v452 = vadd.f32 %v450, %v451
  %v453 = vlog2.pop %v452
  %v454 = vmul.f32 %v453, 0.6931472
  %v455 = vrcp.pop %v452
  %v456 = vmul.f32 1.0, %v455
  %v457 = vld [vmem:[%s7] sm:$0x3f]
  %v458 = vadd.f32 %v432, %v457
  %v459 = vlaneseq
  %v460 = vshrl.u32 %v459, 7
  %v461 = vcvt.s32.f32 %v460
  %v462 = vsel %vm435, %v458, -inf
  %v463 = vrot.slane %v462, 4
  %v464 = vmax.f32 %v462, %v463
  %v465 = vrot.slane %v464, 2
  %v466 = vmax.f32 %v464, %v465
  %v467 = vrot.slane %v466, 1
  %v468 = vmax.f32 %v466, %v467
  %vm469 = vcmp.ge.f32.partialorder %v458, %v468
  %v470 = vsel %vm469, %v461, 6.0
  %v471 = vsel %vm435, %v470, inf
  %v472 = vrot.slane %v471, 4
  %v473 = vmin.f32 %v471, %v472
  %v474 = vrot.slane %v473, 2
  %v475 = vmin.f32 %v473, %v474
  %v476 = vrot.slane %v475, 1
  %v477 = vmin.f32 %v475, %v476
  %vm478 = vcmp.eq.f32.partialorder %v461, %v477
  %v479 = vsel %vm478, 1, 0
  %480 = vst [vmem:[%s8] sm:$0x3f] %v479
  %v481 = vsel %vm478, %v443, 0.0
  %v482 = vsel %vm435, %v481, 0.0
  %v483 = vrot.slane %v482, 4
  %v484 = vadd.f32 %v482, %v483
  %v485 = vrot.slane %v484, 2
  %v486 = vadd.f32 %v484, %v485
  %v487 = vrot.slane %v486, 1
  %v488 = vadd.f32 %v486, %v487
  %v489 = vsub.f32 %v488, %v454
  %v490 = vmul.f32 %v489, 1.442695
  %v491 = vpow.pop %v490
  %v492 = vmul.f32 %v445, %v443
  %v493 = vsel %vm435, %v492, 0.0
  %v494 = vrot.slane %v493, 4
  %v495 = vadd.f32 %v493, %v494
  %v496 = vrot.slane %v495, 2
  %v497 = vadd.f32 %v495, %v496
  %v498 = vrot.slane %v497, 1
  %v499 = vadd.f32 %v497, %v498
  %v500 = vmul.f32 %v499, %v456
  %v501 = vsub.f32 %v454, %v500
  %vm502 = vcmp.eq.s32.totalorder %v460, 0
  %vm503 = vcmp.eq.s32.totalorder %v460, 1
  %v504 = vsel %vm503, %v491, %v501
  %v505 = vsel %vm502, %v489, %v504
  %506 = vst [vmem:[%s9] sm:$0x7] %v505
  // Predicated region
  $region34: #{ppo_actor_forward.1} parent=0 // pred_check
    _
  $region35: #{ppo_actor_forward.1} parent=0 // pred_check_branch
    %508 = sbr.rel (0) target = $region37
  $region36: #{ppo_actor_forward.1} parent=0 // pred_region
    _
  $region37: #{ppo_actor_forward.1} parent=0 // pred_fallthru
    _
  // Predicated region
  $region38: #{ppo_actor_forward.1} parent=0 // pred_check
    _
  $region39: #{ppo_actor_forward.1} parent=0 // pred_check_branch
    %510 = sbr.rel (0) target = $region41
  $region40: #{ppo_actor_forward.1} parent=0 // pred_region
    _
  $region41: #{ppo_actor_forward.1} parent=0 // pred_fallthru
    _
  // Predicated region
  $region42: #{ppo_actor_forward.1} parent=0 // pred_check
    _
  $region43: #{ppo_actor_forward.1} parent=0 // pred_check_branch
    %512 = sbr.rel (0) target = $region45
  $region44: #{ppo_actor_forward.1} parent=0 // pred_region
    _
  $region45: #{ppo_actor_forward.1} parent=0 // pred_fallthru
    _
  // Predicated region
  $region46: #{ppo_actor_forward.1} parent=0 // pred_check
    _
  $region47: #{ppo_actor_forward.1} parent=0 // pred_check_branch
    %514 = sbr.rel (0) target = $region49
  $region48: #{ppo_actor_forward.1} parent=0 // pred_region
    _
  $region49: #{ppo_actor_forward.1} parent=0 // pred_fallthru
    _

</llo_original>
